<compile_context>
chip_gen: v6e
topology: v6e:2x2x1
jax: 0.10.0
libtpu: 0.0.40
codegen_flags: <defaults>
</compile_context>

<pallas_src>
import jax
import jax.numpy as jnp
from jax.experimental import pallas as pl
from jax.experimental.pallas import tpu as pltpu


def _mish_kernel(x_ref, o_ref):
    x = x_ref[...].astype(jnp.float32)
    # tanh(softplus(x)) = (e^{2x} + 2 e^x) / (e^{2x} + 2 e^x + 2).
    # Overflow-free single-exp form with t = exp(-|x|):
    #   s   = t^2 (x >= 0)  |  s = 1 (x < 0)
    #   den = (1+t)^2 + s   ==  1+2t+2t^2 (x>=0)  /  t^2+2t+2 (x<0),  den in (1, 5]
    #   mish = x * num/den  ==  x - 2*x*s/den     (num never materialised)
    # NOTE: on a ragged last grid block the padded rows hold uninitialized
    # data; exp/reciprocal on that garbage is harmless (no FP traps on TPU)
    # and the store is masked -- do not "fix" this with explicit masking.
    t = jnp.exp(-jnp.abs(x))                    # 1 EUP transcendental / element
    s = jnp.where(x >= 0.0, t * t, 1.0)
    u = 1.0 + t
    den = u * u + s
    inv = pl.reciprocal(den, approx=True)       # EUP slot, nearly free
    inv = inv * (2.0 - den * inv)               # 1 Newton step -> ~f32 accurate (keep!)
    o_ref[...] = (x - 2.0 * (x * s) * inv).astype(o_ref.dtype)


_LANE_CANDIDATES = (2048, 1024, 512, 256, 128)
# ~4 MiB per block: per-grid-step overhead (~0.35 us) stays <10% of the block's
# HBM time even at v7x's ~3.2 TB/s.  Pipeline cost = 2 buffers x (in + out) =
# 16 MiB, declared explicitly via vmem_limit_bytes below.
_TARGET_BLOCK_BYTES = 4 * 1024 * 1024
# 40 MiB scoped VMEM: above the 16 MiB pipeline (+ headroom), below v7x's
# 64 MiB physical and far below v5e/v6e's 128 MiB physical.
_VMEM_LIMIT_BYTES = 40 * 1024 * 1024


def _sublane(itemsize):
    return {4: 8, 2: 16, 1: 32}.get(itemsize, 8)


def _pick_tiling(n, itemsize):
    """Return (lanes, rows, tile_rows) with rows*lanes == n, else None.

    tile_rows need not divide rows: the grid uses pl.cdiv and Pallas masks the
    ragged last block, so awkward row counts no longer degenerate to tiny tiles.
    """
    sub = _sublane(itemsize)
    for lanes in _LANE_CANDIDATES:               # widest lane dim that divides n
        if n % lanes:
            continue
        rows = n // lanes
        target_rows = max(sub, _TARGET_BLOCK_BYTES // (lanes * itemsize))
        if rows <= target_rows:
            return lanes, rows, rows             # single full-extent block
        tile_rows = (target_rows // sub) * sub   # sublane-aligned, ~4 MiB block
        return lanes, rows, tile_rows
    return None


def _mish_2d(x2d, tile_rows):
    rows, lanes = x2d.shape
    grid = (pl.cdiv(rows, tile_rows),)           # ragged last block is masked
    return pl.pallas_call(
        _mish_kernel,
        out_shape=jax.ShapeDtypeStruct((rows, lanes), x2d.dtype),
        grid_spec=pltpu.PrefetchScalarGridSpec(
            num_scalar_prefetch=0,
            grid=grid,
            in_specs=[pl.BlockSpec((tile_rows, lanes), lambda i: (i, 0))],
            out_specs=pl.BlockSpec((tile_rows, lanes), lambda i: (i, 0)),
        ),
        compiler_params=pltpu.CompilerParams(
            dimension_semantics=(pltpu.PARALLEL,),   # shardable across TCs (v7x)
            vmem_limit_bytes=_VMEM_LIMIT_BYTES,
        ),
    )(x2d)


def mish(x):
    """Elementwise Mish; matches torch `x * tanh(softplus(x))` for any shape/dtype."""
    orig_shape = x.shape
    n = x.size
    if n == 0:
        return x
    itemsize = jnp.dtype(x.dtype).itemsize

    tiling = _pick_tiling(n, itemsize)
    if tiling is not None:
        # Fast path: free reshape into a lane-dense 2-D slab; no pad / slice,
        # so the only HBM traffic is the kernel's own read + write.
        lanes, rows, tile_rows = tiling
        return _mish_2d(x.reshape(rows, lanes), tile_rows).reshape(orig_shape)

    # Rare fallback (flat size not a multiple of 128): pad only to the next
    # multiple of 128 (<=127 wasted elements) and keep large tiles via a
    # ragged cdiv grid.  Costs one extra pad + slice pass around the kernel.
    lanes = 128
    n_pad = pl.cdiv(n, lanes) * lanes
    x_flat = jnp.pad(x.reshape(-1), (0, n_pad - n))
    rows = n_pad // lanes
    sub = _sublane(itemsize)
    target_rows = max(sub, _TARGET_BLOCK_BYTES // (lanes * itemsize))
    tile_rows = rows if rows <= target_rows else (target_rows // sub) * sub
    out = _mish_2d(x_flat.reshape(rows, lanes), tile_rows)
    return out.reshape(-1)[:n].reshape(orig_shape)


if __name__ == "__main__":
    key = jax.random.PRNGKey(0)
    x = jax.random.normal(key, (2, 4, 16, 16), dtype=jnp.float32)  # NCHW, as in CSPDarknet53

    y = mish(x)
    jax.block_until_ready(y)

    # reference check against plain-JAX mish
    ref = x * jnp.tanh(jax.nn.softplus(x))
    assert y.shape == x.shape and y.dtype == x.dtype
    err = float(jnp.max(jnp.abs(y - ref)))
    assert err < 1e-4, err

    # also exercise the (rare) non-multiple-of-128 fallback path
    x2 = jax.random.normal(jax.random.PRNGKey(1), (3, 5, 7), dtype=jnp.float32)
    y2 = mish(x2)
    jax.block_until_ready(y2)
    ref2 = x2 * jnp.tanh(jax.nn.softplus(x2))
    err2 = float(jnp.max(jnp.abs(y2 - ref2)))
    assert y2.shape == x2.shape and err2 < 1e-4, err2

    print("KERNEL_OK")
</pallas_src>

<mosaic_0001>
module attributes {stable_mosaic.version = 11 : i64} {
  func.func @_mish_kernel(%arg0: i32, %arg1: memref<1x2048xf32, #tpu.memory_space<vmem>>, %arg2: memref<1x2048xf32, #tpu.memory_space<vmem>>) attributes {dimension_semantics = [#tpu.dimension_semantics<parallel>], iteration_bounds = array<i64: 1>, scalar_prefetch = 0 : i64, scratch_operands = 0 : i64, tpu.core_type = #tpu.core_type<tc>, window_params = [{transform_indices = @transform_0, window_bounds = array<i64: 1, 2048>}, {transform_indices = @transform_1, window_bounds = array<i64: 1, 2048>}]} {
    %c0 = arith.constant 0 : index
    %c0_0 = arith.constant 0 : index
    %0 = vector.load %arg1[%c0, %c0_0] : memref<1x2048xf32, #tpu.memory_space<vmem>>, vector<1x2048xf32>
    %1 = math.absf %0 : vector<1x2048xf32>
    %cst = arith.constant 0.000000e+00 : f32
    %2 = vector.broadcast %cst : f32 to vector<1x2048xf32>
    %3 = arith.subf %2, %1 : vector<1x2048xf32>
    %4 = math.exp %3 : vector<1x2048xf32>
    %cst_1 = arith.constant 0.000000e+00 : f32
    %5 = vector.broadcast %cst_1 : f32 to vector<1x2048xf32>
    %6 = arith.cmpf oge, %0, %5 : vector<1x2048xf32>
    %7 = arith.mulf %4, %4 : vector<1x2048xf32>
    %cst_2 = arith.constant 1.000000e+00 : f32
    %8 = vector.broadcast %cst_2 : f32 to vector<1x2048xf32>
    %9 = arith.select %6, %7, %8 : vector<1x2048xi1>, vector<1x2048xf32>
    %cst_3 = arith.constant 1.000000e+00 : f32
    %10 = vector.broadcast %cst_3 : f32 to vector<1x2048xf32>
    %11 = arith.addf %10, %4 : vector<1x2048xf32>
    %12 = arith.mulf %11, %11 : vector<1x2048xf32>
    %13 = arith.addf %12, %9 : vector<1x2048xf32>
    %14 = tpu.reciprocal %13 {approx = true} : vector<1x2048xf32> -> vector<1x2048xf32>
    %15 = arith.mulf %13, %14 : vector<1x2048xf32>
    %cst_4 = arith.constant 2.000000e+00 : f32
    %16 = vector.broadcast %cst_4 : f32 to vector<1x2048xf32>
    %17 = arith.subf %16, %15 : vector<1x2048xf32>
    %18 = arith.mulf %14, %17 : vector<1x2048xf32>
    %19 = arith.mulf %0, %9 : vector<1x2048xf32>
    %cst_5 = arith.constant 2.000000e+00 : f32
    %20 = vector.broadcast %cst_5 : f32 to vector<1x2048xf32>
    %21 = arith.mulf %20, %19 : vector<1x2048xf32>
    %22 = arith.mulf %21, %18 : vector<1x2048xf32>
    %23 = arith.subf %0, %22 : vector<1x2048xf32>
    %c0_6 = arith.constant 0 : index
    %c0_7 = arith.constant 0 : index
    %24 = vector.load %arg2[%c0_6, %c0_7] : memref<1x2048xf32, #tpu.memory_space<vmem>>, vector<1x2048xf32>
    tpu.vector_store %arg2[%c0_6, %c0_7], %23 {strides = array<i32>} : memref<1x2048xf32, #tpu.memory_space<vmem>>, vector<1x2048xf32>,
    return
  }
  func.func @transform_0(%arg0: i32) -> (i32, i32) {
    %c0_i32 = arith.constant 0 : i32
    %c0_i32_0 = arith.constant 0 : i32
    return %arg0, %c0_i32 : i32, i32
  }
  func.func @transform_1(%arg0: i32) -> (i32, i32) {
    %c0_i32 = arith.constant 0 : i32
    %c0_i32_0 = arith.constant 0 : i32
    return %arg0, %c0_i32 : i32, i32
  }
}

</mosaic_0001>

<llo_original>
// kernel: tpu_custom_call.1
$region0: #{tpu_custom_call.1}
  #allocation0 [shape = 'u32[]', space=smem, size = 0x4, offset = 0x4, fixed_abs, tag = 'smem constant byte address 0x4 - core index']
  #allocation1 [shape = 'u32[144,128]{1,0:T(1,128)}', space=vmem, size = 0x12000, scoped, tag = 'internal scratch']
  %s0 = inlined_call_operand.hbm [shape: f32[1,2048], index: 0, kind: input, shape index: {}]
  %s1 = inlined_call_operand.hbm [shape: f32[1,2048], index: 1, kind: output, shape index: {}]
  %s2 = sld [smem:[#allocation0]]
  $region18: #{tpu_custom_call.1} parent=0
    _
  %s4 = ssub.s32 1, %s2
  %s5 = scalar_select 0, %s4, %s2
  $region1: #{tpu_custom_call.1} parent=0
    #allocation2 [shape = 'u8[8192]{0}', space=vmem, size = 0x2000, scoped, tag = 'input window, operand 0, single buffered']
    #allocation3 [shape = 's32[1]{0}', space=sflag, size = 0x4, scoped, tag = 'scoped memory for tpu_custom_call.1']
    #allocation4 [shape = 's32[1]{0}', space=sflag, size = 0x4, scoped, tag = 'scoped memory for tpu_custom_call.1']
    #allocation5 [shape = 'u8[8192]{0}', space=vmem, size = 0x2000, scoped, tag = 'output window, operand 0, single buffered']
    %6 = vsyncpa [#allocation3], 0
    %7 = vsyncpa [#allocation4], 0
    // Predicated region
    $region2: #{tpu_custom_call.1} parent=1 // pred_check
      _
    $region3: #{tpu_custom_call.1} parent=1 // pred_check_branch
      %9 = sbr.rel (0) target = $region5
    $region4: #{tpu_custom_call.1} parent=1 // pred_region
      %s11 = ssub.s32 256, 256
      %12 = vsyncadd [#allocation3], %s11
      %s14 = sshll.u32 [#allocation2], 4
      %s15 = int_to_ptr.vmem [resolvable:$true] %s14
      %17 = dma.hbm_to_vmem [thread:$0]  %s0, 256, %s15, [#allocation3]
    $region5: #{tpu_custom_call.1} parent=1 // pred_fallthru
      _
    // Predicated region
    $region6: #{tpu_custom_call.1} parent=1 // pred_check
      _
    $region7: #{tpu_custom_call.1} parent=1 // pred_check_branch
      %19 = sbr.rel (0) target = $region9
    $region8: #{tpu_custom_call.1} parent=1 // pred_region
      %20 = dma.done [#allocation3], 256
    $region9: #{tpu_custom_call.1} parent=1 // pred_fallthru
      _
    %v21 = vld [vmem:[#allocation2] sm:$0xff]
    %v22 = vld [vmem:[#allocation2 + $0x8] sm:$0xff]
    %v23 = vand.u32 2147483647, %v21
    %v24 = vand.u32 2147483647, %v22
    %v25 = vsub.f32 0.0, %v23
    %v26 = vsub.f32 0.0, %v24
    %v27 = vmul.f32 %v25, 1.442695
    %v28 = vpow.pop %v27
    %v29 = vmul.f32 %v26, 1.442695
    %v30 = vpow.pop %v29
    %vm31 = vcmp.ge.f32.partialorder %v21, 0.0
    %vm32 = vcmp.ge.f32.partialorder %v22, 0.0
    %v33 = vmul.f32 %v28, %v28
    %v34 = vmul.f32 %v30, %v30
    %v35 = vsel %vm31, %v33, 1.0
    %v36 = vsel %vm32, %v34, 1.0
    %v37 = vadd.f32 %v28, 1.0
    %v38 = vadd.f32 %v30, 1.0
    %v39 = vmul.f32 %v37, %v37
    %v40 = vmul.f32 %v38, %v38
    %v41 = vadd.f32 %v39, %v35
    %v42 = vadd.f32 %v40, %v36
    %v43 = vrcp.pop %v41
    %v44 = vrcp.pop %v42
    %v45 = vmul.f32 %v41, %v43
    %v46 = vmul.f32 %v42, %v44
    %v47 = vsub.f32 2.0, %v45
    %v48 = vsub.f32 2.0, %v46
    %v49 = vmul.f32 %v43, %v47
    %v50 = vmul.f32 %v44, %v48
    %v51 = vmul.f32 %v21, %v35
    %v52 = vmul.f32 %v22, %v36
    %v53 = vmul.f32 %v51, 2.0
    %v54 = vmul.f32 %v52, 2.0
    %v55 = vmul.f32 %v53, %v49
    %v56 = vmul.f32 %v54, %v50
    %v57 = vsub.f32 %v21, %v55
    %v58 = vsub.f32 %v22, %v56
    %59 = vst [vmem:[#allocation5] sm:$0xff] %v57
    %60 = vst [vmem:[#allocation5 + $0x8] sm:$0xff] %v58
    // Predicated region
    $region10: #{tpu_custom_call.1} parent=1 // pred_check
      _
    $region11: #{tpu_custom_call.1} parent=1 // pred_check_branch
      %62 = sbr.rel (0) target = $region13
    $region12: #{tpu_custom_call.1} parent=1 // pred_region
      %s64 = ssub.s32 256, 256
      %65 = vsyncadd [#allocation4], %s64
      %s67 = sshll.u32 [#allocation5], 4
      %s68 = int_to_ptr.vmem [resolvable:$true] %s67
      %70 = dma.vmem_to_hbm [thread:$0]  %s68, 256, %s1, [#allocation4]
    $region13: #{tpu_custom_call.1} parent=1 // pred_fallthru
      _
    // Predicated region
    $region14: #{tpu_custom_call.1} parent=1 // pred_check
      _
    $region15: #{tpu_custom_call.1} parent=1 // pred_check_branch
      %72 = sbr.rel (0) target = $region17
    $region16: #{tpu_custom_call.1} parent=1 // pred_region
      %73 = dma.done [#allocation4], 256
    $region17: #{tpu_custom_call.1} parent=1 // pred_fallthru
      _
    %74 = vsyncpa [#allocation3], 1
    %75 = vsyncpa [#allocation4], 1

</llo_original>
